<compile_context>
chip_gen: v7x
topology: tpu7x:2x2x1
jax: 0.10.0
libtpu: 0.0.40
codegen_flags: <defaults>
</compile_context>

<pallas_src>
import functools
import math

import jax
import jax.numpy as jnp
from jax import lax
from jax.experimental import pallas as pl
from jax.experimental.pallas import tpu as pltpu


def _round_up(x: int, m: int) -> int:
    return -(-x // m) * m


def _largest_divisor(n: int, candidates) -> int:
    for c in candidates:
        if n % c == 0:
            return c
    return n


def _device_kind() -> str:
    try:
        return jax.devices()[0].device_kind.lower()
    except Exception:  # pragma: no cover - CPU/interpret fallback
        return ""


# ---------------------------------------------------------------------------
# Kernels
# ---------------------------------------------------------------------------
def _gram_kernel(xi_ref, xj_ref, o_ref):
    """One (tm, tn) tile of x @ x.T, accumulated in-place over the k axis."""
    @pl.when(pl.program_id(2) == 0)
    def _():
        o_ref[...] = jnp.zeros_like(o_ref)

    # Contract the last dim of both row blocks -> MXU, no transpose pass.
    o_ref[...] += lax.dot_general(
        xi_ref[...],
        xj_ref[...],
        dimension_numbers=(((1,), (1,)), ((), ())),
        preferred_element_type=jnp.float32,
    )


def _gram_tri_kernel(i_tbl_ref, j_tbl_ref, xi_ref, xj_ref, up_ref, lo_ref):
    """Upper-triangle tile (i <= j) of x @ x.T plus its mirrored (j, i) tile.

    i_tbl_ref / j_tbl_ref are scalar-prefetched lookup tables (used only by
    the index_maps).  up_ref holds the (i, j) block, lo_ref the (j, i) block.
    """
    k = pl.program_id(1)

    @pl.when(k == 0)
    def _():
        up_ref[...] = jnp.zeros_like(up_ref)

    up_ref[...] += lax.dot_general(
        xi_ref[...],
        xj_ref[...],
        dimension_numbers=(((1,), (1,)), ((), ())),
        preferred_element_type=jnp.float32,
    )

    @pl.when(k == pl.num_programs(1) - 1)
    def _():
        # One XLU transpose per tile-pair, amortized over all k steps.
        lo_ref[...] = up_ref[...].T


# ---------------------------------------------------------------------------
# Wrapper
# ---------------------------------------------------------------------------
@functools.partial(jax.jit, static_argnames=("tm", "tn", "tk", "symmetric"))
def dot_product_decoder(x: jax.Array, *, tm=None, tn=None, tk=None, symmetric=None):
    """adj_logits = x @ x.T computed with a tiled Pallas TPU kernel."""
    N, D = x.shape
    itemsize = x.dtype.itemsize
    kind = _device_kind()
    is_v7 = ("v7" in kind) or ("tpu7" in kind)
    user_tm = tm is not None

    # ---- contraction (k) tiling --------------------------------------------
    if tk is None:
        tk = D if D <= 512 else _largest_divisor(_round_up(D, 128), (512, 256, 128))
    Dp = _round_up(D, tk)
    kt = Dp // tk

    # ---- output (i, j) tiling ----------------------------------------------
    if tn is None:
        if N < 256:
            tn = N                                 # full-extent block, no pad
        else:
            Npad = _round_up(N, 128)
            tn = _largest_divisor(Npad, (512, 256, 128))
            if Npad // tn == 1:                    # Np in {256, 512}: split so
                tn = Npad // 2                     # both v7x TCs get a tile
    if tm is None:
        tm = tn

    Np = N if (N % tm == 0 and N % tn == 0) else _round_up(N, math.lcm(tm, tn))
    nb_i, nb_j = Np // tm, Np // tn

    # Gram symmetry only pays when compute-bound (the wrapper merge is an
    # extra elementwise pass over the N^2 output).
    if symmetric is None:
        symmetric = (Dp >= 1024) and (tm == tn) and (nb_i >= 2)

    # v5e/v6e: a taller row tile halves the re-streaming of the right operand.
    # Kept <= 512 on v7x (64 MiB VMEM) and skipped on the symmetric path.
    if (not symmetric) and (not user_tm) and (not is_v7) and kt > 1 \
            and Np % 1024 == 0 and tm < 1024:
        tm = 1024
        nb_i = Np // tm

    # Zero-pad -- exact for a Gram matrix (zero columns add nothing, padded
    # rows are sliced away below).
    xp = x if (Np, Dp) == (N, D) else jnp.pad(x, ((0, Np - N), (0, Dp - D)))

    # VMEM budget: double-buffered inputs + resident/double-buffered output(s).
    in_bytes = 2 * (tm * tk + tn * tk) * itemsize
    out_bytes = 2 * tm * tn * 4 * (2 if symmetric else 1)
    vmem_limit = int(1.5 * (in_bytes + out_bytes)) + (4 << 20)
    vmem_limit = max(vmem_limit, 32 << 20)
    vmem_limit = min(vmem_limit, (56 << 20) if is_v7 else (96 << 20))

    if not symmetric:
        flops = 2 * Np * Np * Dp
        bytes_accessed = int(
            itemsize * Np * Dp * (nb_j if kt > 1 else 1)   # left row blocks
            + itemsize * Np * Dp * nb_i                    # right row blocks
            + 4 * Np * Np                                  # f32 output
        )
        out = pl.pallas_call(
            _gram_kernel,
            out_shape=jax.ShapeDtypeStruct((Np, Np), jnp.float32),
            grid_spec=pltpu.PrefetchScalarGridSpec(
                num_scalar_prefetch=0,
                grid=(nb_i, nb_j, kt),
                in_specs=[
                    pl.BlockSpec((tm, tk), lambda i, j, k: (i, k)),  # rows i
                    pl.BlockSpec((tn, tk), lambda i, j, k: (j, k)),  # rows j
                ],
                out_specs=pl.BlockSpec((tm, tn), lambda i, j, k: (i, j)),
            ),
            compiler_params=pltpu.CompilerParams(
                dimension_semantics=("parallel", "parallel", "arbitrary"),
                vmem_limit_bytes=vmem_limit,
            ),
            cost_estimate=pl.CostEstimate(
                flops=flops, transcendentals=0, bytes_accessed=bytes_accessed
            ),
        )(xp, xp)
    else:
        # Upper-triangle tile enumeration via scalar-prefetched lookup tables.
        nb = nb_i
        pairs_i, pairs_j = [], []
        for i in range(nb):
            for j in range(i, nb):
                pairs_i.append(i)
                pairs_j.append(j)
        num_tiles = len(pairs_i)
        i_tbl = jnp.asarray(pairs_i, dtype=jnp.int32)
        j_tbl = jnp.asarray(pairs_j, dtype=jnp.int32)

        flops = 2 * num_tiles * tm * tm * Dp
        bytes_accessed = int(
            itemsize * 2 * num_tiles * tm * Dp + 4 * 2 * num_tiles * tm * tm
        )

        up, lo = pl.pallas_call(
            _gram_tri_kernel,
            out_shape=(
                jax.ShapeDtypeStruct((Np, Np), jnp.float32),
                jax.ShapeDtypeStruct((Np, Np), jnp.float32),
            ),
            grid_spec=pltpu.PrefetchScalarGridSpec(
                num_scalar_prefetch=2,
                grid=(num_tiles, kt),
                in_specs=[
                    pl.BlockSpec((tm, tk), lambda t, k, it, jt: (it[t], k)),
                    pl.BlockSpec((tm, tk), lambda t, k, it, jt: (jt[t], k)),
                ],
                out_specs=(
                    pl.BlockSpec((tm, tm), lambda t, k, it, jt: (it[t], jt[t])),
                    pl.BlockSpec((tm, tm), lambda t, k, it, jt: (jt[t], it[t])),
                ),
            ),
            compiler_params=pltpu.CompilerParams(
                dimension_semantics=("arbitrary", "arbitrary"),
                vmem_limit_bytes=vmem_limit,
            ),
            cost_estimate=pl.CostEstimate(
                flops=flops, transcendentals=0, bytes_accessed=bytes_accessed
            ),
        )(i_tbl, j_tbl, xp, xp)

        # Merge: upper output is valid on blocks with block_row <= block_col,
        # lower output on block_row >= block_col (diagonal blocks agree).
        blk_r = lax.broadcasted_iota(jnp.int32, (Np, Np), 0) // tm
        blk_c = lax.broadcasted_iota(jnp.int32, (Np, Np), 1) // tm
        out = jnp.where(blk_r <= blk_c, up, lo)

    if Np != N:
        out = out[:N, :N]
    if out.dtype != x.dtype:
        out = out.astype(x.dtype)     # match torch.mm output dtype for non-f32 x
    return out


if __name__ == "__main__":
    # Primary shapes implied by the module: seq(N)=8, hidden=32.
    key = jax.random.PRNGKey(0)
    N, hidden_dim = 8, 32
    x = jax.random.normal(key, (N, hidden_dim), dtype=jnp.float32)

    adj_logits = jax.block_until_ready(dot_product_decoder(x))
    ref = x @ x.T
    assert adj_logits.shape == (N, N)
    assert jnp.allclose(adj_logits, ref, atol=1e-4, rtol=1e-4), "mismatch vs reference"

    # Extra coverage: (384, 256) exercises the multi-tile non-symmetric path,
    # (300, 1024) exercises row padding + multi-step k + the Gram-symmetry path.
    for n2, d2 in ((384, 256), (300, 1024)):
        x2 = jax.random.normal(jax.random.PRNGKey(1), (n2, d2), dtype=jnp.float32)
        out2 = jax.block_until_ready(dot_product_decoder(x2))
        ref2 = x2 @ x2.T
        assert out2.shape == (n2, n2)
        assert jnp.allclose(out2, ref2, atol=5e-3, rtol=5e-4), f"mismatch at {(n2, d2)}"

    print("KERNEL_OK")
</pallas_src>

<mosaic_0001>
module attributes {stable_mosaic.version = 11 : i64} {
  func.func @_gram_kernel(%arg0: i32, %arg1: i32, %arg2: i32, %arg3: memref<8x32xf32, #tpu.memory_space<vmem>>, %arg4: memref<8x32xf32, #tpu.memory_space<vmem>>, %arg5: memref<8x8xf32, #tpu.memory_space<vmem>>) attributes {dimension_semantics = [#tpu.dimension_semantics<parallel>, #tpu.dimension_semantics<parallel>, #tpu.dimension_semantics<arbitrary>], iteration_bounds = array<i64: 1, 1, 1>, scalar_prefetch = 0 : i64, scratch_operands = 0 : i64, tpu.core_type = #tpu.core_type<tc>, window_params = [{transform_indices = @transform_0, window_bounds = array<i64: 8, 32>}, {transform_indices = @transform_1, window_bounds = array<i64: 8, 32>}, {transform_indices = @transform_2, window_bounds = array<i64: 8, 8>}]} {
    %c0_i32 = arith.constant 0 : i32
    %0 = arith.cmpi eq, %arg2, %c0_i32 : i32
    %1 = arith.extui %0 : i1 to i32
    %c0_i32_0 = arith.constant 0 : i32
    %2 = arith.cmpi ne, %1, %c0_i32_0 : i32
    scf.if %2 {
      %cst_8 = arith.constant 0.000000e+00 : f32
      %9 = vector.broadcast %cst_8 : f32 to vector<8x8xf32>
      %c0_9 = arith.constant 0 : index
      %c0_10 = arith.constant 0 : index
      %10 = vector.load %arg5[%c0_9, %c0_10] : memref<8x8xf32, #tpu.memory_space<vmem>>, vector<8x8xf32>
      tpu.vector_store %arg5[%c0_9, %c0_10], %9 {strides = array<i32>} : memref<8x8xf32, #tpu.memory_space<vmem>>, vector<8x8xf32>,
    } else {
    }
    %c0 = arith.constant 0 : index
    %c0_1 = arith.constant 0 : index
    %3 = vector.load %arg5[%c0, %c0_1] : memref<8x8xf32, #tpu.memory_space<vmem>>, vector<8x8xf32>
    %c0_2 = arith.constant 0 : index
    %c0_3 = arith.constant 0 : index
    %4 = vector.load %arg3[%c0_2, %c0_3] : memref<8x32xf32, #tpu.memory_space<vmem>>, vector<8x32xf32>
    %c0_4 = arith.constant 0 : index
    %c0_5 = arith.constant 0 : index
    %5 = vector.load %arg4[%c0_4, %c0_5] : memref<8x32xf32, #tpu.memory_space<vmem>>, vector<8x32xf32>
    %cst = arith.constant dense<0.000000e+00> : vector<8x8xf32>
    %6 = tpu.matmul %4, %5, %cst {dimension_numbers = #tpu.dot_dimension_numbers<[1], [1], [0], [0], [0, 0, 1, 0], [], []>} : vector<8x32xf32>, vector<8x32xf32>, vector<8x8xf32> -> vector<8x8xf32>
    %7 = arith.addf %3, %6 : vector<8x8xf32>
    %c0_6 = arith.constant 0 : index
    %c0_7 = arith.constant 0 : index
    %8 = vector.load %arg5[%c0_6, %c0_7] : memref<8x8xf32, #tpu.memory_space<vmem>>, vector<8x8xf32>
    tpu.vector_store %arg5[%c0_6, %c0_7], %7 {strides = array<i32>} : memref<8x8xf32, #tpu.memory_space<vmem>>, vector<8x8xf32>,
    return
  }
  func.func @transform_0(%arg0: i32, %arg1: i32, %arg2: i32) -> (i32, i32) {
    %c0_i32 = arith.constant 0 : i32
    return %arg0, %arg2 : i32, i32
  }
  func.func @transform_1(%arg0: i32, %arg1: i32, %arg2: i32) -> (i32, i32) {
    %c0_i32 = arith.constant 0 : i32
    return %arg1, %arg2 : i32, i32
  }
  func.func @transform_2(%arg0: i32, %arg1: i32, %arg2: i32) -> (i32, i32) {
    %c0_i32 = arith.constant 0 : i32
    return %arg0, %arg1 : i32, i32
  }
}

</mosaic_0001>

<llo_original>
// kernel: dot_product_decoder.1
$region0: #{dot_product_decoder.1}
  #allocation0 [shape = 'u32[]', space=smem, size = 0x4, offset = 0x4, fixed_abs, tag = 'smem constant byte address 0x4 - core index']
  #allocation1 [shape = 'u32[144,128]{1,0:T(1,128)}', space=vmem, size = 0x12000, scoped, tag = 'internal scratch']
  %s0 = inlined_call_operand.hbm [shape: f32[8,32], index: 0, kind: input, shape index: {}, may-alias: {0,1}]
  %s1 = inlined_call_operand.hbm [shape: f32[8,32], index: 1, kind: input, shape index: {}, may-alias: {0,1}]
  %s2 = inlined_call_operand.hbm [shape: f32[8,8], index: 2, kind: output, shape index: {}]
  %s3 = sld [smem:[#allocation0]]
  $region30: #{dot_product_decoder.1} parent=0
    _
  %s5 = ssub.s32 1, %s3
  %s6 = scalar_select 0, %s5, %s3
  $region1: #{dot_product_decoder.1} parent=0
    #allocation2 [shape = 'u8[4096]{0}', space=vmem, size = 0x1000, scoped, tag = 'input window, operand 0, single buffered']
    #allocation3 [shape = 's32[1]{0}', space=sflag, size = 0x4, scoped, tag = 'scoped memory for dot_product_decoder.1']
    #allocation4 [shape = 's32[1]{0}', space=sflag, size = 0x4, scoped, tag = 'scoped memory for dot_product_decoder.1']
    #allocation5 [shape = 'u8[4096]{0}', space=vmem, size = 0x1000, scoped, tag = 'input window, operand 1, single buffered']
    #allocation6 [shape = 's32[1]{0}', space=sflag, size = 0x4, scoped, tag = 'scoped memory for dot_product_decoder.1']
    #allocation7 [shape = 'u8[4096]{0}', space=vmem, size = 0x1000, scoped, tag = 'output window, operand 0, single buffered']
    %7 = vsyncpa [#allocation3], 0
    %8 = vsyncpa [#allocation6], 0
    %9 = vsyncpa [#allocation4], 0
    // Predicated region
    $region2: #{dot_product_decoder.1} parent=1 // pred_check
      _
    $region3: #{dot_product_decoder.1} parent=1 // pred_check_branch
      %11 = sbr.rel (0) target = $region5
    $region4: #{dot_product_decoder.1} parent=1 // pred_region
      %s13 = ssub.s32 128, 128
      %14 = vsyncadd [#allocation3], %s13
      %s16 = sshll.u32 [#allocation2], 4
      %s17 = int_to_ptr.vmem [resolvable:$true] %s16
      %19 = dma.hbm_to_vmem [thread:$0]  %s0, 128, %s17, [#allocation3]
    $region5: #{dot_product_decoder.1} parent=1 // pred_fallthru
      _
    // Predicated region
    $region6: #{dot_product_decoder.1} parent=1 // pred_check
      _
    $region7: #{dot_product_decoder.1} parent=1 // pred_check_branch
      %21 = sbr.rel (0) target = $region9
    $region8: #{dot_product_decoder.1} parent=1 // pred_region
      %s23 = ssub.s32 128, 128
      %24 = vsyncadd [#allocation6], %s23
      %s26 = sshll.u32 [#allocation5], 4
      %s27 = int_to_ptr.vmem [resolvable:$true] %s26
      %29 = dma.hbm_to_vmem [thread:$0]  %s1, 128, %s27, [#allocation6]
    $region9: #{dot_product_decoder.1} parent=1 // pred_fallthru
      _
    // Predicated region
    $region10: #{dot_product_decoder.1} parent=1 // pred_check
      _
    $region11: #{dot_product_decoder.1} parent=1 // pred_check_branch
      %31 = sbr.rel (0) target = $region13
    $region12: #{dot_product_decoder.1} parent=1 // pred_region
      %32 = dma.done [#allocation3], 128
    $region13: #{dot_product_decoder.1} parent=1 // pred_fallthru
      _
    // Predicated region
    $region14: #{dot_product_decoder.1} parent=1 // pred_check
      _
    $region15: #{dot_product_decoder.1} parent=1 // pred_check_branch
      %34 = sbr.rel (0) target = $region17
    $region16: #{dot_product_decoder.1} parent=1 // pred_region
      %35 = dma.done [#allocation6], 128
    $region17: #{dot_product_decoder.1} parent=1 // pred_fallthru
      _
    %p36 = scmp.eq.s32.totalorder 0, 0
    // Predicated region
    $region18: #{dot_product_decoder.1} parent=1 // pred_check
      %p37 = pneg %p36
    $region19: #{dot_product_decoder.1} parent=1 // pred_check_branch
      %39 = sbr.rel (%p37) target = $region21
    $region20: #{dot_product_decoder.1} parent=1 // pred_region
      %vm40 = vcmask 64512
      %41 = vst.msk [vmem:[#allocation7] sm:$0xff] %vm40, 0.0
    $region21: #{dot_product_decoder.1} parent=1 // pred_fallthru
      _
    %v42 = vld [vmem:[#allocation7] sm:$0xff]
    %v43 = vld [vmem:[#allocation2] sm:$0xff]
    %v44 = vld [vmem:[#allocation5] sm:$0xff]
    %vm45 = vcmask 261120
    %v47 = vsel %vm45, %v43, 0
    %v50 = vsel %vm45, %v44, 0
    %52 = vmatprep.subr.mxu0 0.0
    %53 = vmatpush1.xpose.msra.mxu0 %v50
    %54 = vmatprep.subr.mxu0 0.0
    %55 = vmatpush1.xpose.msra.mxu0 0.0
    %56 = vmatprep.subr.mxu0 0.0
    %57 = vmatpush1.xpose.msra.mxu0 0.0
    %58 = vmatprep.subr.mxu0 0.0
    %59 = vmatpush1.xpose.msra.mxu0 0.0
    %60 = vmatprep.subr.mxu0 0.0
    %61 = vmatpush1.xpose.msra.mxu0 0.0
    %62 = vmatprep.subr.mxu0 0.0
    %63 = vmatpush1.xpose.msra.mxu0 0.0
    %64 = vmatprep.subr.mxu0 0.0
    %65 = vmatpush1.xpose.msra.mxu0 0.0
    %66 = vmatprep.subr.mxu0 0.0
    %67 = vmatpush1.xpose.msra.mxu0 0.0
    %68 = vmatprep.subr.mxu0 0.0
    %69 = vmatpush1.xpose.msra.mxu0 0.0
    %70 = vmatprep.subr.mxu0 0.0
    %71 = vmatpush1.xpose.msra.mxu0 0.0
    %72 = vmatprep.subr.mxu0 0.0
    %73 = vmatpush1.xpose.msra.mxu0 0.0
    %74 = vmatprep.subr.mxu0 0.0
    %75 = vmatpush1.xpose.msra.mxu0 0.0
    %76 = vmatprep.subr.mxu0 0.0
    %77 = vmatpush1.xpose.msra.mxu0 0.0
    %78 = vmatprep.subr.mxu0 0.0
    %79 = vmatpush1.xpose.msra.mxu0 0.0
    %80 = vmatprep.subr.mxu0 0.0
    %81 = vmatpush1.xpose.msra.mxu0 0.0
    %82 = vmatprep.subr.mxu0 0.0
    %83 = vmatpush1.xpose.msra.mxu0 0.0
    %84 = vmatprep.subr.mxu0 0.0
    %85 = vmatpush1.xpose.msra.mxu0 0.0
    %86 = vmatprep.subr.mxu0 0.0
    %87 = vmatpush1.xpose.msra.mxu0 0.0
    %88 = vmatprep.subr.mxu0 0.0
    %89 = vmatpush1.xpose.msra.mxu0 0.0
    %90 = vmatprep.subr.mxu0 0.0
    %91 = vmatpush1.xpose.msra.mxu0 0.0
    %92 = vmatprep.subr.mxu0 0.0
    %93 = vmatpush1.xpose.msra.mxu0 0.0
    %94 = vmatprep.subr.mxu0 0.0
    %95 = vmatpush1.xpose.msra.mxu0 0.0
    %96 = vmatprep.subr.mxu0 0.0
    %97 = vmatpush1.xpose.msra.mxu0 0.0
    %98 = vmatprep.subr.mxu0 0.0
    %99 = vmatpush1.xpose.msra.mxu0 0.0
    %100 = vmatprep.subr.mxu0 0.0
    %101 = vmatpush1.xpose.msra.mxu0 0.0
    %102 = vmatprep.subr.mxu0 0.0
    %103 = vmatpush1.xpose.msra.mxu0 0.0
    %104 = vmatprep.subr.mxu0 0.0
    %105 = vmatpush1.xpose.msra.mxu0 0.0
    %106 = vmatprep.subr.mxu0 0.0
    %107 = vmatpush1.xpose.msra.mxu0 0.0
    %108 = vmatprep.subr.mxu0 0.0
    %109 = vmatpush1.xpose.msra.mxu0 0.0
    %110 = vmatprep.subr.mxu0 0.0
    %111 = vmatpush1.xpose.msra.mxu0 0.0
    %112 = vmatprep.subr.mxu0 0.0
    %113 = vmatpush1.xpose.msra.mxu0 0.0
    %114 = vmatprep.subr.mxu0 0.0
    %115 = vmatpush1.xpose.msra.mxu0 0.0
    %116 = vmatprep.mubr.f32.mxu0 0.0
    %117 = vmatmul.mubr.f32.gmra.mrb[0].mxu0 %v47
    %v118 = vpop.f32.mrb[0].mxu0
    %v119 = vadd.f32 0.0, %v118
    %v120 = vpop.f32.mrb[0].mxu0
    %121 = vdwg.mxu0
    %v122 = vadd.f32 %v42, %v119
    %vm123 = vcmask 64512
    %124 = vst.msk [vmem:[#allocation7] sm:$0xff] %vm123, %v122
    // Predicated region
    $region22: #{dot_product_decoder.1} parent=1 // pred_check
      _
    $region23: #{dot_product_decoder.1} parent=1 // pred_check_branch
      %126 = sbr.rel (0) target = $region25
    $region24: #{dot_product_decoder.1} parent=1 // pred_region
      %s128 = ssub.s32 128, 128
      %129 = vsyncadd [#allocation4], %s128
      %s131 = sshll.u32 [#allocation7], 4
      %s132 = int_to_ptr.vmem [resolvable:$true] %s131
      %134 = dma.vmem_to_hbm [thread:$0]  %s132, 128, %s2, [#allocation4]
    $region25: #{dot_product_decoder.1} parent=1 // pred_fallthru
      _
    // Predicated region
    $region26: #{dot_product_decoder.1} parent=1 // pred_check
      _
    $region27: #{dot_product_decoder.1} parent=1 // pred_check_branch
      %136 = sbr.rel (0) target = $region29
    $region28: #{dot_product_decoder.1} parent=1 // pred_region
      %137 = dma.done [#allocation4], 128
    $region29: #{dot_product_decoder.1} parent=1 // pred_fallthru
      _
    %138 = vsyncpa [#allocation3], 1
    %139 = vsyncpa [#allocation6], 1
    %140 = vsyncpa [#allocation4], 1

</llo_original>
